<compile_context>
chip_gen: v5e
topology: v5e:2x2
jax: 0.10.0
libtpu: 0.0.40
codegen_flags: <defaults>
</compile_context>

<pallas_src>
import functools

import jax
import jax.numpy as jnp
from jax.experimental import pallas as pl
from jax.experimental.pallas import tpu as pltpu

_NUM_CORES = 2  # leading "parallel" grid axis (v7x has 2 TCs; no-op elsewhere)


def _make_joints_mse_kernel(*, has_weight, scale, total_rows, block_rows,
                            num_cols, num_row_blocks, blocks_per_core,
                            acc_rows):
    ragged = (total_rows % block_rows) != 0
    has_phantom = (_NUM_CORES * blocks_per_core) != num_row_blocks
    first_masked_block = num_row_blocks - 1 if ragged else num_row_blocks
    folds = block_rows // acc_rows

    def kernel(*refs):
        if has_weight:
            pred_ref, gt_ref, w2_ref, o_ref, acc_ref = refs
        else:
            pred_ref, gt_ref, o_ref, acc_ref = refs

        c = pl.program_id(0)
        i = pl.program_id(1)
        global_block = c * blocks_per_core + i

        @pl.when(i == 0)
        def _():
            acc_ref[...] = jnp.zeros_like(acc_ref)

        # In-kernel cast (free on the VPU), diff, square, optional row weight.
        d = pred_ref[...].astype(jnp.float32) - gt_ref[...].astype(jnp.float32)
        sq = d * d
        if has_weight:
            # Clamp exactly like the input index_map so phantom steps stay
            # in-bounds (their values are fully masked below anyway).
            row0 = jnp.minimum(global_block, num_row_blocks - 1) * block_rows
            if block_rows % 8 == 0:
                row0 = pl.multiple_of(row0, 8)
            sq = sq * w2_ref[pl.ds(row0, block_rows), :]   # (block_rows,1) bcast

        def fold(x):
            if folds == 1:
                return x
            # Sublane-aligned fold onto the (acc_rows, C) accumulator:
            # pure vreg adds, no lane crossing.
            return x.reshape(folds, acc_rows, num_cols).sum(axis=0)

        if not (ragged or has_phantom):
            acc_ref[...] += fold(sq)
        else:
            @pl.when(global_block < first_masked_block)
            def _():
                acc_ref[...] += fold(sq)                    # unmasked fast path

            @pl.when(global_block >= first_masked_block)
            def _():
                # Ragged final block / phantom steps only: mask after all
                # arithmetic so OOB garbage (Inf/NaN) never hits the acc.
                row_ids = (global_block * block_rows +
                           jax.lax.broadcasted_iota(jnp.int32, sq.shape, 0))
                acc_ref[...] += fold(jnp.where(row_ids < total_rows, sq, 0.0))

        @pl.when(i == pl.num_programs(1) - 1)
        def _():
            # One cross-lane reduction + static scale per core; lane-dense
            # unmasked (8,128) store into this core's private output block.
            partial = jnp.sum(acc_ref[...]) * scale
            o_ref[...] = jnp.full((8, 128), partial, dtype=jnp.float32)

    return kernel


def joints_mse_loss(output, target, target_weight=None, *,
                    use_target_weight=True,
                    target_tile_bytes=6 << 20,
                    block_rows=None):
    """Pallas equivalent of JointsMSELoss.forward(output, target, target_weight)."""
    assert output.shape == target.shape, "output and target must match"
    B, J = int(output.shape[0]), int(output.shape[1])
    HW = 1
    for s in output.shape[2:]:
        HW *= int(s)
    R, C = B * J, HW

    pred2 = output.reshape(R, C)        # native dtype, no upcast copy
    gt2 = target.reshape(R, C)
    itemsize = jnp.dtype(pred2.dtype).itemsize

    # Row-tile sizing: ~target_tile_bytes per input buffer, rounded to the
    # dtype's sublane packing (f32: 8, bf16: 16, int8/fp8: 32).
    sublane_mult = max(8, 32 // itemsize)
    if block_rows is None:
        rows = max(1, target_tile_bytes // max(1, C * itemsize))
        if rows >= R:
            block_rows = R
        else:
            block_rows = max(sublane_mult, (rows // sublane_mult) * sublane_mult)
    block_rows = int(block_rows)

    num_row_blocks = pl.cdiv(R, block_rows)
    blocks_per_core = pl.cdiv(num_row_blocks, _NUM_CORES)
    acc_rows = 8 if block_rows % 8 == 0 else block_rows

    scale = 0.5 / float(J * B * HW)     # 0.5 * per-joint mean, averaged over J

    # Row-block index, clamped so an odd block count split over 2 cores
    # (phantom last step) never indexes past the array; kernel masks it.
    def in_map(c, i):
        return (jnp.minimum(c * blocks_per_core + i, num_row_blocks - 1), 0)

    in_specs = [
        pl.BlockSpec((block_rows, C), in_map),
        pl.BlockSpec((block_rows, C), in_map),
    ]
    args = [pred2, gt2]

    if use_target_weight:
        assert target_weight is not None, "target_weight required"
        w = target_weight.reshape(B, J).astype(jnp.float32)
        w2 = (w * w).reshape(R, 1)
        r_pad = num_row_blocks * block_rows
        if r_pad > R:                   # tiny (R,1) column; padding is negligible
            w2 = jnp.pad(w2, ((0, r_pad - R), (0, 0)))
        # DMA'd once (constant index_map over the full column), sliced in-kernel.
        in_specs.append(pl.BlockSpec((r_pad, 1), lambda c, i: (0, 0)))
        args.append(w2)

    kernel = _make_joints_mse_kernel(
        has_weight=use_target_weight, scale=scale, total_rows=R,
        block_rows=block_rows, num_cols=C, num_row_blocks=num_row_blocks,
        blocks_per_core=blocks_per_core, acc_rows=acc_rows)

    # Explicit VMEM budget: 2 streaming inputs x 2 pipeline buffers x tile,
    # plus the once-DMA'd weight column (lane-padded to 128), (8,C) acc, out.
    tile_bytes = block_rows * C * itemsize
    w2_bytes = (num_row_blocks * block_rows * 128 * 4) if use_target_weight else 0
    acc_bytes = acc_rows * max(C, 128) * 4
    vmem_need = 4 * tile_bytes + 2 * w2_bytes + acc_bytes + (2 << 20)
    vmem_limit = int(max(vmem_need, 8 << 20))

    flops = (4 if use_target_weight else 3) * R * C
    bytes_accessed = (2 * R * C * itemsize
                      + (R * 4 if use_target_weight else 0)
                      + _NUM_CORES * 8 * 128 * 4)

    out = pl.pallas_call(
        kernel,
        out_shape=jax.ShapeDtypeStruct((_NUM_CORES * 8, 128), jnp.float32),
        grid_spec=pltpu.PrefetchScalarGridSpec(
            num_scalar_prefetch=0,
            grid=(_NUM_CORES, blocks_per_core),
            in_specs=in_specs,
            out_specs=pl.BlockSpec((8, 128), lambda c, i: (c, 0)),
            scratch_shapes=[pltpu.VMEM((acc_rows, C), jnp.float32)],
        ),
        compiler_params=pltpu.CompilerParams(
            dimension_semantics=("parallel", "arbitrary"),
            vmem_limit_bytes=vmem_limit,
        ),
        cost_estimate=pl.CostEstimate(
            flops=flops, transcendentals=0, bytes_accessed=bytes_accessed),
    )(*args)

    # Sum the per-core partials (each core broadcast-filled its (8,128) block).
    return out[::8, 0].sum()


def _joints_mse_loss_ref(output, target, target_weight, use_target_weight):
    """Plain-JAX mirror of the PyTorch forward (per-joint loop)."""
    B, J = output.shape[0], output.shape[1]
    pred = output.reshape(B, J, -1).astype(jnp.float32)
    gt = target.reshape(B, J, -1).astype(jnp.float32)
    loss = 0.0
    for j in range(J):
        hp, hg = pred[:, j], gt[:, j]
        if use_target_weight:
            wj = target_weight.reshape(B, J, 1)[:, j].astype(jnp.float32)
            loss = loss + 0.5 * jnp.mean((hp * wj - hg * wj) ** 2)
        else:
            loss = loss + 0.5 * jnp.mean((hp - hg) ** 2)
    return loss / J


if __name__ == "__main__":
    key = jax.random.PRNGKey(0)
    k1, k2, k3, k4, k5 = jax.random.split(key, 5)

    # Small heatmap-like inputs: batch=2, joints=4, spatial=16x16.
    B, J, H, W = 2, 4, 16, 16
    output = jax.random.normal(k1, (B, J, H, W), dtype=jnp.float32)
    target = jax.random.normal(k2, (B, J, H, W), dtype=jnp.float32)
    target_weight = jax.random.uniform(k3, (B, J, 1), dtype=jnp.float32)

    # use_target_weight=True
    loss_w = jax.block_until_ready(
        joints_mse_loss(output, target, target_weight, use_target_weight=True))
    ref_w = _joints_mse_loss_ref(output, target, target_weight, True)
    assert jnp.allclose(loss_w, ref_w, rtol=1e-5, atol=1e-6), (loss_w, ref_w)

    # use_target_weight=False (weight input and multiply dropped entirely).
    loss_nw = jax.block_until_ready(
        joints_mse_loss(output, target, None, use_target_weight=False))
    ref_nw = _joints_mse_loss_ref(output, target, target_weight, False)
    assert jnp.allclose(loss_nw, ref_nw, rtol=1e-5, atol=1e-6), (loss_nw, ref_nw)

    # Multi-block + ragged-final-block + two-core-split path:
    # R = 24 rows, block_rows = 16 -> 2 row blocks (one per "core"), last ragged.
    B2, J2 = 2, 12
    out2 = jax.random.normal(k4, (B2, J2, H, W), dtype=jnp.float32)
    tgt2 = jax.random.normal(k5, (B2, J2, H, W), dtype=jnp.float32)
    tw2 = jax.random.uniform(jax.random.PRNGKey(1), (B2, J2, 1), dtype=jnp.float32)
    loss_m = jax.block_until_ready(
        joints_mse_loss(out2, tgt2, tw2, use_target_weight=True, block_rows=16))
    ref_m = _joints_mse_loss_ref(out2, tgt2, tw2, True)
    assert jnp.allclose(loss_m, ref_m, rtol=1e-5, atol=1e-6), (loss_m, ref_m)

    # bf16 streaming path (native-dtype DMA, in-kernel f32 cast).
    out_bf = output.astype(jnp.bfloat16)
    tgt_bf = target.astype(jnp.bfloat16)
    loss_bf = jax.block_until_ready(
        joints_mse_loss(out_bf, tgt_bf, target_weight, use_target_weight=True))
    ref_bf = _joints_mse_loss_ref(out_bf, tgt_bf, target_weight, True)
    assert jnp.allclose(loss_bf, ref_bf, rtol=1e-2, atol=1e-4), (loss_bf, ref_bf)

    print("KERNEL_OK")
</pallas_src>

<mosaic_0001>
module attributes {stable_mosaic.version = 11 : i64} {
  func.func @kernel(%arg0: i32, %arg1: i32, %arg2: memref<8x256xf32, #tpu.memory_space<vmem>>, %arg3: memref<8x256xf32, #tpu.memory_space<vmem>>, %arg4: memref<8x1xf32, #tpu.memory_space<vmem>>, %arg5: memref<8x128xf32, #tpu.memory_space<vmem>>, %arg6: memref<8x256xf32, #tpu.memory_space<vmem>>) attributes {dimension_semantics = [#tpu.dimension_semantics<parallel>, #tpu.dimension_semantics<arbitrary>], iteration_bounds = array<i64: 2, 1>, scalar_prefetch = 0 : i64, scratch_operands = 1 : i64, tpu.core_type = #tpu.core_type<tc>, window_params = [{transform_indices = @transform_0, window_bounds = array<i64: 8, 256>}, {transform_indices = @transform_1, window_bounds = array<i64: 8, 256>}, {pipeline_mode = #tpu.pipeline_mode<synchronous>, transform_indices = @transform_2, window_bounds = array<i64: 8, 1>}, {transform_indices = @transform_3, window_bounds = array<i64: 8, 128>}]} {
    %c1_i32 = arith.constant 1 : i32
    %0 = arith.muli %arg0, %c1_i32 : i32
    %1 = arith.addi %0, %arg1 : i32
    %c0_i32 = arith.constant 0 : i32
    %2 = arith.cmpi eq, %arg1, %c0_i32 : i32
    %3 = arith.extui %2 : i1 to i32
    %c0_i32_0 = arith.constant 0 : i32
    %4 = arith.cmpi ne, %3, %c0_i32_0 : i32
    scf.if %4 {
      %cst = arith.constant 0.000000e+00 : f32
      %25 = vector.broadcast %cst : f32 to vector<8x256xf32>
      %c0_12 = arith.constant 0 : index
      %c0_13 = arith.constant 0 : index
      %26 = vector.load %arg6[%c0_12, %c0_13] : memref<8x256xf32, #tpu.memory_space<vmem>>, vector<8x256xf32>
      tpu.vector_store %arg6[%c0_12, %c0_13], %25 {strides = array<i32>} : memref<8x256xf32, #tpu.memory_space<vmem>>, vector<8x256xf32>,
    } else {
    }
    %c0 = arith.constant 0 : index
    %c0_1 = arith.constant 0 : index
    %5 = vector.load %arg2[%c0, %c0_1] : memref<8x256xf32, #tpu.memory_space<vmem>>, vector<8x256xf32>
    %c0_2 = arith.constant 0 : index
    %c0_3 = arith.constant 0 : index
    %6 = vector.load %arg3[%c0_2, %c0_3] : memref<8x256xf32, #tpu.memory_space<vmem>>, vector<8x256xf32>
    %7 = arith.subf %5, %6 : vector<8x256xf32>
    %8 = arith.mulf %7, %7 : vector<8x256xf32>
    %c0_i32_4 = arith.constant 0 : i32
    %9 = arith.minsi %1, %c0_i32_4 : i32
    %c8_i32 = arith.constant 8 : i32
    %10 = arith.muli %9, %c8_i32 : i32
    %11 = tpu.assume_multiple %10, 8 : i32
    %12 = arith.index_cast %11 : i32 to index
    %c0_5 = arith.constant 0 : index
    %13 = vector.load %arg4[%12, %c0_5] : memref<8x1xf32, #tpu.memory_space<vmem>>, vector<8x1xf32>
    %14 = vector.broadcast %13 : vector<8x1xf32> to vector<8x256xf32>
    %15 = arith.mulf %8, %14 : vector<8x256xf32>
    %c1_i32_6 = arith.constant 1 : i32
    %16 = arith.cmpi slt, %1, %c1_i32_6 : i32
    %17 = arith.extui %16 : i1 to i32
    %c0_i32_7 = arith.constant 0 : i32
    %18 = arith.cmpi ne, %17, %c0_i32_7 : i32
    scf.if %18 {
      %c0_12 = arith.constant 0 : index
      %c0_13 = arith.constant 0 : index
      %25 = vector.load %arg6[%c0_12, %c0_13] : memref<8x256xf32, #tpu.memory_space<vmem>>, vector<8x256xf32>
      %26 = arith.addf %25, %15 : vector<8x256xf32>
      %c0_14 = arith.constant 0 : index
      %c0_15 = arith.constant 0 : index
      %27 = vector.load %arg6[%c0_14, %c0_15] : memref<8x256xf32, #tpu.memory_space<vmem>>, vector<8x256xf32>
      tpu.vector_store %arg6[%c0_14, %c0_15], %26 {strides = array<i32>} : memref<8x256xf32, #tpu.memory_space<vmem>>, vector<8x256xf32>,
    } else {
    }
    %c1_i32_8 = arith.constant 1 : i32
    %19 = arith.cmpi sge, %1, %c1_i32_8 : i32
    %20 = arith.extui %19 : i1 to i32
    %c0_i32_9 = arith.constant 0 : i32
    %21 = arith.cmpi ne, %20, %c0_i32_9 : i32
    scf.if %21 {
      %c8_i32_12 = arith.constant 8 : i32
      %25 = arith.muli %1, %c8_i32_12 : i32
      %26 = tpu.iota {dimensions = array<i32: 0>} : vector<8x256xi32>
      %27 = vector.broadcast %25 : i32 to vector<8x256xi32>
      %28 = arith.addi %27, %26 : vector<8x256xi32>
      %c0_13 = arith.constant 0 : index
      %c0_14 = arith.constant 0 : index
      %29 = vector.load %arg6[%c0_13, %c0_14] : memref<8x256xf32, #tpu.memory_space<vmem>>, vector<8x256xf32>
      %c8_i32_15 = arith.constant 8 : i32
      %30 = vector.broadcast %c8_i32_15 : i32 to vector<8x256xi32>
      %31 = arith.cmpi slt, %28, %30 : vector<8x256xi32>
      %cst = arith.constant 0.000000e+00 : f32
      %32 = vector.broadcast %cst : f32 to vector<8x256xf32>
      %33 = arith.select %31, %15, %32 : vector<8x256xi1>, vector<8x256xf32>
      %34 = arith.addf %29, %33 : vector<8x256xf32>
      %c0_16 = arith.constant 0 : index
      %c0_17 = arith.constant 0 : index
      %35 = vector.load %arg6[%c0_16, %c0_17] : memref<8x256xf32, #tpu.memory_space<vmem>>, vector<8x256xf32>
      tpu.vector_store %arg6[%c0_16, %c0_17], %34 {strides = array<i32>} : memref<8x256xf32, #tpu.memory_space<vmem>>, vector<8x256xf32>,
    } else {
    }
    %c0_i32_10 = arith.constant 0 : i32
    %22 = arith.cmpi eq, %arg1, %c0_i32_10 : i32
    %23 = arith.extui %22 : i1 to i32
    %c0_i32_11 = arith.constant 0 : i32
    %24 = arith.cmpi ne, %23, %c0_i32_11 : i32
    scf.if %24 {
      %c0_12 = arith.constant 0 : index
      %c0_13 = arith.constant 0 : index
      %25 = vector.load %arg6[%c0_12, %c0_13] : memref<8x256xf32, #tpu.memory_space<vmem>>, vector<8x256xf32>
      %26 = vector.shape_cast %25 : vector<8x256xf32> to vector<1x8x256xf32>
      %cst = arith.constant dense<0.000000e+00> : vector<1xf32>
      %27 = vector.multi_reduction <add>, %26, %cst [1, 2] : vector<1x8x256xf32> to vector<1xf32>
      %28 = vector.shape_cast %27 : vector<1xf32> to vector<1x1x1xf32>
      %29 = vector.extract %28[0, 0, 0] : f32 from vector<1x1x1xf32>
      %cst_14 = arith.constant 2.44140625E-4 : f32
      %30 = arith.mulf %29, %cst_14 : f32
      %31 = vector.broadcast %30 : f32 to vector<8x128xf32>
      %c0_15 = arith.constant 0 : index
      %c0_16 = arith.constant 0 : index
      %32 = vector.load %arg5[%c0_15, %c0_16] : memref<8x128xf32, #tpu.memory_space<vmem>>, vector<8x128xf32>
      tpu.vector_store %arg5[%c0_15, %c0_16], %31 {strides = array<i32>} : memref<8x128xf32, #tpu.memory_space<vmem>>, vector<8x128xf32>,
    } else {
    }
    return
  }
  func.func @transform_0(%arg0: i32, %arg1: i32) -> (i32, i32) {
    %c1_i32 = arith.constant 1 : i32
    %0 = arith.muli %arg0, %c1_i32 : i32
    %1 = arith.addi %0, %arg1 : i32
    %c0_i32 = arith.constant 0 : i32
    %2 = arith.minsi %1, %c0_i32 : i32
    %c0_i32_0 = arith.constant 0 : i32
    %c0_i32_1 = arith.constant 0 : i32
    return %2, %c0_i32_0 : i32, i32
  }
  func.func @transform_1(%arg0: i32, %arg1: i32) -> (i32, i32) {
    %c1_i32 = arith.constant 1 : i32
    %0 = arith.muli %arg0, %c1_i32 : i32
    %1 = arith.addi %0, %arg1 : i32
    %c0_i32 = arith.constant 0 : i32
    %2 = arith.minsi %1, %c0_i32 : i32
    %c0_i32_0 = arith.constant 0 : i32
    %c0_i32_1 = arith.constant 0 : i32
    return %2, %c0_i32_0 : i32, i32
  }
  func.func @transform_2(%arg0: i32, %arg1: i32) -> (i32, i32) {
    %c0_i32 = arith.constant 0 : i32
    %c0_i32_0 = arith.constant 0 : i32
    %c0_i32_1 = arith.constant 0 : i32
    return %c0_i32, %c0_i32_0 : i32, i32
  }
  func.func @transform_3(%arg0: i32, %arg1: i32) -> (i32, i32) {
    %c0_i32 = arith.constant 0 : i32
    %c0_i32_0 = arith.constant 0 : i32
    return %arg0, %c0_i32 : i32, i32
  }
}

</mosaic_0001>

<llo_original>
// kernel: tpu_custom_call.1
$region0: #{tpu_custom_call.1}
  #allocation0 [shape = 'u32[]', space=smem, size = 0x4, offset = 0x4, fixed_abs, tag = 'smem constant byte address 0x4 - core index']
  #allocation1 [shape = 'u32[72,128]{1,0:T(1,128)}', space=vmem, size = 0x9000, scoped, tag = 'internal scratch']
  #allocation2 [shape = 'f32[8,256]{1,0:T(8,128)}', space=vmem, size = 0x2000, scoped, tag = 'scratch operand']
  %s0 = inlined_call_operand.hbm [shape: f32[8,256], index: 0, kind: input, shape index: {}]
  %s1 = inlined_call_operand.hbm [shape: f32[8,256], index: 1, kind: input, shape index: {}]
  %s2 = inlined_call_operand.vmem [shape: f32[8,1], index: 2, kind: input, shape index: {}]
  %s3 = inlined_call_operand.hbm [shape: f32[16,128], index: 3, kind: output, shape index: {}]
  %s4 = sld [smem:[#allocation0]]
  $region69: #{tpu_custom_call.1} parent=0
    _
  %s6 = ssub.s32 1, %s4
  %s7 = scalar_select 0, %s6, %s4
  $region1: #{tpu_custom_call.1} parent=0
    #allocation3 [shape = 'u8[16384]{0}', space=vmem, size = 0x4000, scoped, tag = 'input window, operand 0']
    #allocation4 [shape = 's32[2]{0}', space=sflag, size = 0x8, scoped, tag = 'scoped memory for tpu_custom_call.1']
    #allocation5 [shape = 's32[2]{0}', space=sflag, size = 0x8, scoped, tag = 'scoped memory for tpu_custom_call.1']
    #allocation6 [shape = 'u8[16384]{0}', space=vmem, size = 0x4000, scoped, tag = 'input window, operand 1']
    #allocation7 [shape = 's32[2]{0}', space=sflag, size = 0x8, scoped, tag = 'scoped memory for tpu_custom_call.1']
    #allocation8 [shape = 'u8[8192]{0}', space=vmem, size = 0x2000, scoped, tag = 'output window, operand 0']
    %8 = vsyncpa [#allocation4], 0
    %s9 = scalar_lea.sflag [#allocation4], 1
    %10 = vsyncpa %s9, 0
    %11 = vsyncpa [#allocation7], 0
    %s12 = scalar_lea.sflag [#allocation7], 1
    %13 = vsyncpa %s12, 0
    %14 = vsyncpa [#allocation5], 0
    %s15 = scalar_lea.sflag [#allocation5], 1
    %16 = vsyncpa %s15, 0
    loop: start=0, step=1, limit=4
    $region2: #{tpu_custom_call.1} parent=1 // loop_pre_header
      _
    $region3: #{tpu_custom_call.1} parent=1 // loop_header
      %s18 = sphi 0, %s22
      %p19 = scmp.ge.s32.totalorder %s18, 4
      %s25 = sphi 0, %s37
      %s26 = sphi 0, %s33
      %s27 = sphi 0, %s25
      %s28 = sphi 0, %s26
      %s29 = sphi 0, %s27
      %s30 = sphi 0, %s28
      %s46 = sphi 0, %s48
      %s49 = sphi 0, %s46
      %s50 = sphi 0, %s49
      %s66 = sphi 0, %s50
      %s78 = sphi 0, %s80
      %s81 = sphi 0, %s78
      %s82 = sphi 0, %s81
      %s98 = sphi 0, %s82
      %s102 = sphi 0, %s102
      %s104 = sphi 0, %s102
      %s105 = sphi 0, %s104
      %s119 = sphi 0, %s105
      %s125 = sphi 0, %s127
      %s128 = sphi 0, %s125
      %s129 = sphi 0, %s128
      %s145 = sphi 0, %s129
    $region4: #{tpu_custom_call.1} parent=1 // loop_header_branch
      %21 = sbr.rel (%p19) target = $region8
    $region5: #{tpu_custom_call.1} parent=1 // loop_body
      %s23 = ssub.s32 %s18, 1
      %s24 = ssub.s32 %s18, 2
      %s31 = sadd.s32 1, %s26
      %p32 = scmp.ge.s32.totalorder %s31, 1
      %s33 = scalar_select %p32, 0, %s31
      %s34 = sadd.s32 1, %s25
      %s35 = scalar_select %p32, %s34, %s25
      %p36 = scmp.ge.s32.totalorder %s35, 2
      %s37 = scalar_select %p36, 0, %s35
      %s38 = sadd.s32 %s25, %s26
      %p39 = scmp.lt.s32.totalorder %s38, 0
      %s40 = scalar_select %p39, %s38, 0
      %s41 = sadd.s32 %s37, %s33
      %p42 = scmp.lt.s32.totalorder %s41, 0
      %s43 = scalar_select %p42, %s41, 0
      %s44 = ssub.s32 %s40, %s43
      %p45 = scmp.eq.s32.totalorder %s44, 0
      %s47 = sadd.s32 %s46, 1
      %s48 = scalar_select %p45, %s46, %s47
      %p51 = pneg %p45
      %p52 = scmp.eq.s32.totalorder %s18, 1
      %p53 = por %p51, %p52
      %p54 = scmp.ne.s32.totalorder %s46, %s49
      %p55 = scmp.eq.s32.totalorder %s18, 0
      %p56 = por %p54, %p55
      %p57 = scmp.ne.s32.totalorder %s46, %s49
      %p58 = scmp.eq.s32.totalorder %s23, 1
      %p59 = por %p57, %p58
      %p60 = scmp.ne.s32.totalorder %s49, %s50
      %p61 = scmp.eq.s32.totalorder %s23, 0
      %p62 = por %p60, %p61
      %p63 = scmp.ne.s32.totalorder %s49, %s50
      %p64 = scmp.eq.s32.totalorder %s24, 1
      %p65 = por %p63, %p64
      %p67 = scmp.ne.s32.totalorder %s50, %s66
      %p68 = scmp.eq.s32.totalorder %s24, 0
      %p69 = por %p67, %p68
      %s70 = sadd.s32 %s25, %s26
      %p71 = scmp.lt.s32.totalorder %s70, 0
      %s72 = scalar_select %p71, %s70, 0
      %s73 = sadd.s32 %s37, %s33
      %p74 = scmp.lt.s32.totalorder %s73, 0
      %s75 = scalar_select %p74, %s73, 0
      %s76 = ssub.s32 %s72, %s75
      %p77 = scmp.eq.s32.totalorder %s76, 0
      %s79 = sadd.s32 %s78, 1
      %s80 = scalar_select %p77, %s78, %s79
      %p83 = pneg %p77
      %p84 = scmp.eq.s32.totalorder %s18, 1
      %p85 = por %p83, %p84
      %p86 = scmp.ne.s32.totalorder %s78, %s81
      %p87 = scmp.eq.s32.totalorder %s18, 0
      %p88 = por %p86, %p87
      %p89 = scmp.ne.s32.totalorder %s78, %s81
      %p90 = scmp.eq.s32.totalorder %s23, 1
      %p91 = por %p89, %p90
      %p92 = scmp.ne.s32.totalorder %s81, %s82
      %p93 = scmp.eq.s32.totalorder %s23, 0
      %p94 = por %p92, %p93
      %p95 = scmp.ne.s32.totalorder %s81, %s82
      %p96 = scmp.eq.s32.totalorder %s24, 1
      %p97 = por %p95, %p96
      %p99 = scmp.ne.s32.totalorder %s82, %s98
      %p100 = scmp.eq.s32.totalorder %s24, 0
      %p101 = por %p99, %p100
      %s103 = sadd.s32 %s102, 1
      %p106 = scmp.eq.s32.totalorder %s18, 1
      %p107 = scmp.ne.s32.totalorder %s102, %s104
      %p108 = scmp.eq.s32.totalorder %s18, 0
      %p109 = por %p107, %p108
      %p110 = scmp.ne.s32.totalorder %s102, %s104
      %p111 = scmp.eq.s32.totalorder %s23, 1
      %p112 = por %p110, %p111
      %p113 = scmp.ne.s32.totalorder %s104, %s105
      %p114 = scmp.eq.s32.totalorder %s23, 0
      %p115 = por %p113, %p114
      %p116 = scmp.ne.s32.totalorder %s104, %s105
      %p117 = scmp.eq.s32.totalorder %s24, 1
      %p118 = por %p116, %p117
      %p120 = scmp.ne.s32.totalorder %s105, %s119
      %p121 = scmp.eq.s32.totalorder %s24, 0
      %p122 = por %p120, %p121
      %s123 = ssub.s32 %s25, %s37
      %p124 = scmp.eq.s32.totalorder %s123, 0
      %s126 = sadd.s32 %s125, 1
      %s127 = scalar_select %p124, %s125, %s126
      %p130 = pneg %p124
      %p131 = scmp.eq.s32.totalorder %s18, 1
      %p132 = por %p130, %p131
      %p133 = scmp.ne.s32.totalorder %s125, %s128
      %p134 = scmp.eq.s32.totalorder %s18, 0
      %p135 = por %p133, %p134
      %p136 = scmp.ne.s32.totalorder %s125, %s128
      %p137 = scmp.eq.s32.totalorder %s23, 1
      %p138 = por %p136, %p137
      %p139 = scmp.ne.s32.totalorder %s128, %s129
      %p140 = scmp.eq.s32.totalorder %s23, 0
      %p141 = por %p139, %p140
      %p142 = scmp.ne.s32.totalorder %s128, %s129
      %p143 = scmp.eq.s32.totalorder %s24, 1
      %p144 = por %p142, %p143
      %p146 = scmp.ne.s32.totalorder %s129, %s145
      %p147 = scmp.eq.s32.totalorder %s24, 0
      %p148 = por %p146, %p147
      %p149 = scmp.le.s32.totalorder 1, %s18
      %p150 = scmp.lt.s32.totalorder %s18, 3
      %p151 = pnand %p149, %p150
      %p152 = pneg %p151
      // Predicated region
      $region9: #{tpu_custom_call.1} parent=5 // pred_check
        _
      $region10: #{tpu_custom_call.1} parent=5 // pred_check_branch
        %154 = sbr.rel (%p151) target = $region12
      $region11: #{tpu_custom_call.1} parent=5 // pred_region
        %s155 = ssub.s32 %s18, 1
        // Predicated region
        $region13: #{tpu_custom_call.1} parent=11 // pred_check
          %p156 = pneg %p115
        $region14: #{tpu_custom_call.1} parent=11 // pred_check_branch
          %158 = sbr.rel (%p156) target = $region16
        $region15: #{tpu_custom_call.1} parent=11 // pred_region
          _
        $region16: #{tpu_custom_call.1} parent=11 // pred_fallthru
          _
      $region12: #{tpu_custom_call.1} parent=5 // pred_fallthru
        _
      %p159 = scmp.lt.s32.totalorder %s18, 2
      // Predicated region
      $region17: #{tpu_custom_call.1} parent=5 // pred_check
        %p160 = pneg %p159
      $region18: #{tpu_custom_call.1} parent=5 // pred_check_branch
        %162 = sbr.rel (%p160) target = $region20
      $region19: #{tpu_custom_call.1} parent=5 // pred_region
        // Predicated region
        $region21: #{tpu_custom_call.1} parent=19 // pred_check
          %p163 = pneg %p56
        $region22: #{tpu_custom_call.1} parent=19 // pred_check_branch
          %165 = sbr.rel (%p163) target = $region24
        $region23: #{tpu_custom_call.1} parent=19 // pred_region
          %s166 = sand.u32 %s46, 1
          %s167 = scalar_lea.sflag [#allocation4], %s166
          %s168 = sand.u32 %s46, 1
          %s169 = smul.addr %s168, 16
          %s170 = scalar_lea.vmem [#allocation3], %s169
          %s171 = sadd.s32 %s25, %s26
          %p172 = scmp.lt.s32.totalorder %s171, 0
          %s173 = scalar_select %p172, %s171, 0
          %175 = vsyncadd %s167, 0
          %s176 = smul.addr %s173, 2
          %s177 = smul.addr %s176, 8
          %s178 = scalar_lea.hbm %s0, %s177
          %s180 = sshll.u32 %s178, 4
          %s181 = int_to_ptr.hbm [resolvable:$true] %s180
          %s182 = sshll.u32 %s170, 4
          %s183 = int_to_ptr.vmem [resolvable:$true] %s182
          %185 = dma.hbm_to_vmem [thread:$0]  %s181, 256, %s183, %s167
        $region24: #{tpu_custom_call.1} parent=19 // pred_fallthru
          _
        // Predicated region
        $region25: #{tpu_custom_call.1} parent=19 // pred_check
          %p186 = pneg %p88
        $region26: #{tpu_custom_call.1} parent=19 // pred_check_branch
          %188 = sbr.rel (%p186) target = $region28
        $region27: #{tpu_custom_call.1} parent=19 // pred_region
          %s189 = sand.u32 %s78, 1
          %s190 = scalar_lea.sflag [#allocation7], %s189
          %s191 = sand.u32 %s78, 1
          %s192 = smul.addr %s191, 16
          %s193 = scalar_lea.vmem [#allocation6], %s192
          %s194 = sadd.s32 %s25, %s26
          %p195 = scmp.lt.s32.totalorder %s194, 0
          %s196 = scalar_select %p195, %s194, 0
          %198 = vsyncadd %s190, 0
          %s199 = smul.addr %s196, 2
          %s200 = smul.addr %s199, 8
          %s201 = scalar_lea.hbm %s1, %s200
          %s203 = sshll.u32 %s201, 4
          %s204 = int_to_ptr.hbm [resolvable:$true] %s203
          %s205 = sshll.u32 %s193, 4
          %s206 = int_to_ptr.vmem [resolvable:$true] %s205
          %208 = dma.hbm_to_vmem [thread:$0]  %s204, 256, %s206, %s190
        $region28: #{tpu_custom_call.1} parent=19 // pred_fallthru
          _
      $region20: #{tpu_custom_call.1} parent=5 // pred_fallthru
        _
      %p209 = scmp.le.s32.totalorder 1, %s18
      %p210 = scmp.lt.s32.totalorder %s18, 3
      %p211 = pnand %p209, %p210
      %p212 = pneg %p211
      // Predicated region
      $region29: #{tpu_custom_call.1} parent=5 // pred_check
        _
      $region30: #{tpu_custom_call.1} parent=5 // pred_check_branch
        %214 = sbr.rel (%p211) target = $region32
      $region31: #{tpu_custom_call.1} parent=5 // pred_region
        %s215 = ssub.s32 %s18, 1
        %s216 = sand.u32 %s49, 1
        %s217 = scalar_lea.sflag [#allocation4], %s216
        %s218 = sand.u32 %s49, 1
        %s219 = smul.addr %s218, 16
        %s220 = scalar_lea.vmem [#allocation3], %s219
        // Predicated region
        $region33: #{tpu_custom_call.1} parent=31 // pred_check
          %p221 = pneg %p62
        $region34: #{tpu_custom_call.1} parent=31 // pred_check_branch
          %223 = sbr.rel (%p221) target = $region36
        $region35: #{tpu_custom_call.1} parent=31 // pred_region
          %225 = dma.done %s217, 256
        $region36: #{tpu_custom_call.1} parent=31 // pred_fallthru
          _
        %s226 = sand.u32 %s81, 1
        %s227 = scalar_lea.sflag [#allocation7], %s226
        %s228 = sand.u32 %s81, 1
        %s229 = smul.addr %s228, 16
        %s230 = scalar_lea.vmem [#allocation6], %s229
        // Predicated region
        $region37: #{tpu_custom_call.1} parent=31 // pred_check
          %p231 = pneg %p94
        $region38: #{tpu_custom_call.1} parent=31 // pred_check_branch
          %233 = sbr.rel (%p231) target = $region40
        $region39: #{tpu_custom_call.1} parent=31 // pred_region
          %235 = dma.done %s227, 256
        $region40: #{tpu_custom_call.1} parent=31 // pred_fallthru
          _
        %s236 = sand.u32 %s49, 1
        %s237 = scalar_lea.sflag [#allocation4], %s236
        %s238 = sand.u32 %s49, 1
        %s239 = smul.addr %s238, 16
        %s240 = scalar_lea.vmem [#allocation3], %s239
        %p241 = pneg %p62
        %p242 = pneg %p59
        %s243 = sand.u32 %s81, 1
        %s244 = scalar_lea.sflag [#allocation7], %s243
        %s245 = sand.u32 %s81, 1
        %s246 = smul.addr %s245, 16
        %s247 = scalar_lea.vmem [#allocation6], %s246
        %p248 = pneg %p94
        %p249 = pneg %p91
        %p250 = pneg %p115
        %p251 = pneg %p112
        %p252 = pneg %p141
        %p253 = pneg %p138
        %s254 = sand.u32 %s128, 1
        %s255 = scalar_lea.sflag [#allocation5], %s254
        %s256 = sand.u32 %s128, 1
        %s257 = smul.addr %s256, 8
        %s258 = scalar_lea.vmem [#allocation8], %s257
        %s259 = sadd.s32 %s27, %s28
        %p260 = scmp.lt.s32.totalorder %s259, 0
        %s261 = scalar_select %p260, %s259, 0
        %s262 = sadd.s32 %s27, %s28
        %p263 = scmp.lt.s32.totalorder %s262, 0
        %s264 = scalar_select %p263, %s262, 0
        %s265 = sadd.s32 %s27, %s28
        %p266 = scmp.eq.s32.totalorder %s28, 0
        // Predicated region
        $region41: #{tpu_custom_call.1} parent=31 // pred_check
          %p267 = pneg %p266
        $region42: #{tpu_custom_call.1} parent=31 // pred_check_branch
          %269 = sbr.rel (%p267) target = $region44
        $region43: #{tpu_custom_call.1} parent=31 // pred_region
          %270 = vst [vmem:[#allocation2] sm:$0xff] 0.0
          %271 = vst [vmem:[#allocation2 + $0x8] sm:$0xff] 0.0
        $region44: #{tpu_custom_call.1} parent=31 // pred_fallthru
          _
        %v272 = vld [vmem:[%s220] sm:$0xff]
        %v273 = vld [vmem:[%s220 + $0x8] sm:$0xff]
        %v274 = vld [vmem:[%s230] sm:$0xff]
        %v275 = vld [vmem:[%s230 + $0x8] sm:$0xff]
        %v276 = vsub.f32 %v272, %v274
        %v277 = vsub.f32 %v273, %v275
        %v278 = vmul.f32 %v276, %v276
        %v279 = vmul.f32 %v277, %v277
        %p280 = scmp.lt.s32.totalorder %s265, 0
        %s281 = scalar_select %p280, %s265, 0
        %s282 = smul.u32 %s281, 8
        %s283 = scalar_lea.vmem %s2, %s282
        %v284 = vld [vmem:[%s283] sm:$0xff]
        %286 = vset.pattern.permute.xlu0 0
        %287 = vperm.xlu0 %286, %v284
        %v288 = vpop.permute.xlu0 %287
        %v290 = vmul.f32 %v278, %v288
        %v291 = vmul.f32 %v279, %v288
        %p292 = scmp.lt.s32.totalorder %s265, 1
        // Predicated region
        $region45: #{tpu_custom_call.1} parent=31 // pred_check
          %p293 = pneg %p292
        $region46: #{tpu_custom_call.1} parent=31 // pred_check_branch
          %295 = sbr.rel (%p293) target = $region48
        $region47: #{tpu_custom_call.1} parent=31 // pred_region
          %v296 = vld [vmem:[#allocation2] sm:$0xff]
          %v297 = vld [vmem:[#allocation2 + $0x8] sm:$0xff]
          %v298 = vadd.f32 %v296, %v290
          %v299 = vadd.f32 %v297, %v291
          %300 = vst [vmem:[#allocation2] sm:$0xff] %v298
          %301 = vst [vmem:[#allocation2 + $0x8] sm:$0xff] %v299
        $region48: #{tpu_custom_call.1} parent=31 // pred_fallthru
          _
        %p302 = scmp.ge.s32.totalorder %s265, 1
        // Predicated region
        $region49: #{tpu_custom_call.1} parent=31 // pred_check
          %p303 = pneg %p302
        $region50: #{tpu_custom_call.1} parent=31 // pred_check_branch
          %305 = sbr.rel (%p303) target = $region52
        $region51: #{tpu_custom_call.1} parent=31 // pred_region
          %s306 = smul.u32 %s265, 8
          %v307 = vlaneseq
          %v308 = vshrl.u32 %v307, 7
          %v309 = vstv %s306
          %v310 = vadd.s32 %v309, %v308
          %v311 = vld [vmem:[#allocation2] sm:$0xff]
          %v312 = vld [vmem:[#allocation2 + $0x8] sm:$0xff]
          %vm313 = vcmp.lt.s32.totalorder %v310, 8
          %v314 = vsel %vm313, %v290, 0.0
          %v315 = vsel %vm313, %v291, 0.0
          %v316 = vadd.f32 %v311, %v314
          %v317 = vadd.f32 %v312, %v315
          %318 = vst [vmem:[#allocation2] sm:$0xff] %v316
          %319 = vst [vmem:[#allocation2 + $0x8] sm:$0xff] %v317
        $region52: #{tpu_custom_call.1} parent=31 // pred_fallthru
          _
        // Predicated region
        $region53: #{tpu_custom_call.1} parent=31 // pred_check
          %p320 = pneg %p266
        $region54: #{tpu_custom_call.1} parent=31 // pred_check_branch
          %322 = sbr.rel (%p320) target = $region56
        $region55: #{tpu_custom_call.1} parent=31 // pred_region
          %v323 = vld [vmem:[#allocation2] sm:$0xff]
          %v324 = vld [vmem:[#allocation2 + $0x8] sm:$0xff]
          %v325 = vadd.f32 %v323, %v324
          %326 = vadd.xlane.f32.xlu0 %v325
          %v327 = vpop.xlane.xlu0 %326
          %v328 = vrot.slane %v327, 4
          %v329 = vadd.f32 %v327, %v328
          %v330 = vrot.slane %v329, 2
          %v331 = vadd.f32 %v329, %v330
          %v332 = vrot.slane %v331, 1
          %v333 = vadd.f32 %v331, %v332
          %s334 = vtos %v333
          %s335 = smul.f32 %s334, 0.00024414063
          %v336 = vstv %s335
          %337 = vst [vmem:[%s258] sm:$0xff] %v336
        $region56: #{tpu_custom_call.1} parent=31 // pred_fallthru
          _
        %s338 = sand.u32 %s128, 1
        %s339 = scalar_lea.sflag [#allocation5], %s338
        %s340 = sand.u32 %s128, 1
        %s341 = smul.addr %s340, 8
        %s342 = scalar_lea.vmem [#allocation8], %s341
        // Predicated region
        $region57: #{tpu_custom_call.1} parent=31 // pred_check
          %p343 = pneg %p138
        $region58: #{tpu_custom_call.1} parent=31 // pred_check_branch
          %345 = sbr.rel (%p343) target = $region60
        $region59: #{tpu_custom_call.1} parent=31 // pred_region
          %347 = vsyncadd %s339, 0
          %s348 = smul.addr %s27, 8
          %s349 = scalar_lea.hbm %s3, %s348
          %s351 = sshll.u32 %s342, 4
          %s352 = int_to_ptr.vmem [resolvable:$true] %s351
          %s353 = sshll.u32 %s349, 4
          %s354 = int_to_ptr.hbm [resolvable:$true] %s353
          %356 = dma.vmem_to_hbm [thread:$0]  %s352, 128, %s354, %s339
        $region60: #{tpu_custom_call.1} parent=31 // pred_fallthru
          _
      $region32: #{tpu_custom_call.1} parent=5 // pred_fallthru
        _
      %p357 = scmp.le.s32.totalorder 2, %s18
      // Predicated region
      $region61: #{tpu_custom_call.1} parent=5 // pred_check
        %p358 = pneg %p357
      $region62: #{tpu_custom_call.1} parent=5 // pred_check_branch
        %360 = sbr.rel (%p358) target = $region64
      $region63: #{tpu_custom_call.1} parent=5 // pred_region
        %s361 = ssub.s32 %s18, 2
        // Predicated region
        $region65: #{tpu_custom_call.1} parent=63 // pred_check
          %p362 = pneg %p144
        $region66: #{tpu_custom_call.1} parent=63 // pred_check_branch
          %364 = sbr.rel (%p362) target = $region68
        $region67: #{tpu_custom_call.1} parent=63 // pred_region
          %s365 = sand.u32 %s129, 1
          %s366 = scalar_lea.sflag [#allocation5], %s365
          %s367 = sand.u32 %s129, 1
          %s368 = smul.addr %s367, 8
          %s369 = scalar_lea.vmem [#allocation8], %s368
          %371 = dma.done %s366, 128
        $region68: #{tpu_custom_call.1} parent=63 // pred_fallthru
          _
      $region64: #{tpu_custom_call.1} parent=5 // pred_fallthru
        _
    $region6: #{tpu_custom_call.1} parent=1 // loop_footer
      %s22 = sadd.s32 1, %s18
    $region7: #{tpu_custom_call.1} parent=1 // loop_footer_branch
      %17 = sbr.rel target = $region3
    $region8: #{tpu_custom_call.1} parent=1 // loop_exit
      _
    %372 = vsyncpa [#allocation4], 1
    %s373 = scalar_lea.sflag [#allocation4], 1
    %374 = vsyncpa %s373, 1
    %375 = vsyncpa [#allocation7], 1
    %s376 = scalar_lea.sflag [#allocation7], 1
    %377 = vsyncpa %s376, 1
    %378 = vsyncpa [#allocation5], 1
    %s379 = scalar_lea.sflag [#allocation5], 1
    %380 = vsyncpa %s379, 1

</llo_original>
